<compile_context>
chip_gen: v7x
topology: tpu7x:2x2x1
jax: 0.10.0
libtpu: 0.0.40
codegen_flags: <defaults>
</compile_context>

<pallas_src>
import functools

import jax
import jax.numpy as jnp
from jax.experimental import pallas as pl
from jax.experimental.pallas import tpu as pltpu


def _round_up(n, m):
    return (n + m - 1) // m * m


def _cdiv(a, b):
    return -(-a // b)


def _mlp_body(x, w1_ref, b1_ref, w2_ref, b2_ref, w3_ref, b3_ref,
              probas_ref, logits_ref):
    # Hot path: three matmuls (MXU, f32 accumulation), bias+ReLU (VPU),
    # sigmoid (EUP).
    h1 = jnp.dot(x, w1_ref[...], preferred_element_type=jnp.float32) + b1_ref[...]
    h1 = jnp.maximum(h1, 0.0)                                       # (TB, H)
    h2 = jnp.dot(h1, w2_ref[...], preferred_element_type=jnp.float32) + b2_ref[...]
    h2 = jnp.maximum(h2, 0.0)                                       # (TB, H)
    logits = jnp.dot(h2, w3_ref[...], preferred_element_type=jnp.float32) + b3_ref[...]
    logits_ref[...] = logits                                        # (TB, 2) narrow masked store
    probas_ref[...] = jax.nn.sigmoid(logits)                        # (TB, 2)


def _mlp_kernel(x_ref, *rest):
    # Colored path: x tile is (TB, 392), natural feature width (no K pad).
    _mlp_body(x_ref[...], *rest)


def _mlp_gray_kernel(x_ref, *rest):
    # Grayscale path: x tile is (TB, 2, 196); channel-sum fused in-kernel
    # (cheap VPU/XLU filler under the MXU).
    _mlp_body(jnp.sum(x_ref[...], axis=1), *rest)


def _choose_batch_tiling(B):
    """Returns (TB, B_pad): TB multiple of 8, <= 1024 rows, grid >= 2 when B >= 32."""
    B8 = _round_up(B, 8)
    if B8 < 32:
        return B8, B8                     # tiny batch: single tile
    n_tiles = max(2, _cdiv(B8, 1024))     # >= 2 so v7x can use both TensorCores
    TB = _round_up(_cdiv(B8, n_tiles), 8)
    return TB, TB * n_tiles


@functools.partial(jax.jit, static_argnames=("grayscale_model",))
def cmnist_mlp_forward(x, params, grayscale_model=False):
    """x: (B, 2, 14, 14) float32 NCHW. Returns (probas, logits), both (B, 2) f32."""
    w1, b1, w2, b2, w3, b3 = params
    B = x.shape[0]
    in_dim = w1.shape[0]
    hid = w1.shape[1]
    out_dim = w3.shape[1]

    TB, B_pad = _choose_batch_tiling(B)

    if grayscale_model:
        feat = x.reshape(B, 2, 14 * 14)                # free view; sum fused in kernel
        x_block = (TB, 2, 14 * 14)
        x_imap = lambda i: (i, 0, 0)
        kernel = _mlp_gray_kernel
        x_elems = B_pad * 2 * 14 * 14
    else:
        feat = x.reshape(B, 2 * 14 * 14)               # free view
        x_block = (TB, in_dim)
        x_imap = lambda i: (i, 0)
        kernel = _mlp_kernel
        x_elems = B_pad * in_dim

    if B_pad != B:                                     # small batch-only pad
        pad = [(0, B_pad - B)] + [(0, 0)] * (feat.ndim - 1)
        feat = jnp.pad(feat, pad)

    grid = (B_pad // TB,)

    flops = 2 * B_pad * (in_dim * hid + hid * hid + hid * out_dim)
    bytes_accessed = 4 * (x_elems
                          + in_dim * hid + hid * hid + hid * out_dim   # weights
                          + 2 * hid + out_dim                          # biases
                          + 2 * B_pad * out_dim)                       # probas + logits
    cost = pl.CostEstimate(flops=flops,
                           transcendentals=B_pad * out_dim,            # sigmoid
                           bytes_accessed=bytes_accessed)

    probas_p, logits_p = pl.pallas_call(
        kernel,
        out_shape=(
            jax.ShapeDtypeStruct((B_pad, out_dim), jnp.float32),
            jax.ShapeDtypeStruct((B_pad, out_dim), jnp.float32),
        ),
        grid=grid,
        in_specs=[
            pl.BlockSpec(x_block, x_imap),                   # x tile moves with grid
            pl.BlockSpec((in_dim, hid), lambda i: (0, 0)),   # weights stay VMEM-resident
            pl.BlockSpec((1, hid), lambda i: (0, 0)),
            pl.BlockSpec((hid, hid), lambda i: (0, 0)),
            pl.BlockSpec((1, hid), lambda i: (0, 0)),
            pl.BlockSpec((hid, out_dim), lambda i: (0, 0)),
            pl.BlockSpec((1, out_dim), lambda i: (0, 0)),
        ],
        out_specs=(
            pl.BlockSpec((TB, out_dim), lambda i: (i, 0)),
            pl.BlockSpec((TB, out_dim), lambda i: (i, 0)),
        ),
        compiler_params=pltpu.CompilerParams(
            dimension_semantics=("parallel",),   # v7x: shard batch tiles over 2 TCs
            vmem_limit_bytes=32 << 20,           # fits TB=1024 double-buffered; v7x-safe
        ),
        cost_estimate=cost,
    )(feat, w1, b1, w2, b2, w3, b3)

    if B_pad != B:
        probas_p = probas_p[:B]
        logits_p = logits_p[:B]
    return probas_p, logits_p


def _xavier_uniform(key, fan_in, fan_out):
    # torch.nn.init.xavier_uniform_ bound; stored transposed (fan_in, fan_out)
    # so the kernel does x @ W.
    bound = (6.0 / (fan_in + fan_out)) ** 0.5
    return jax.random.uniform(key, (fan_in, fan_out), jnp.float32, -bound, bound)


def init_params(key, grayscale_model=False, hidden_dim=256):
    in_dim = 14 * 14 if grayscale_model else 2 * 14 * 14
    k1, k2, k3 = jax.random.split(key, 3)
    w1 = _xavier_uniform(k1, in_dim, hidden_dim)
    b1 = jnp.zeros((1, hidden_dim), jnp.float32)
    w2 = _xavier_uniform(k2, hidden_dim, hidden_dim)
    b2 = jnp.zeros((1, hidden_dim), jnp.float32)
    w3 = _xavier_uniform(k3, hidden_dim, 2)
    b3 = jnp.zeros((1, 2), jnp.float32)
    return (w1, b1, w2, b2, w3, b3)


def _ref_forward(x, params, grayscale_model):
    w1, b1, w2, b2, w3, b3 = params
    B = x.shape[0]
    if grayscale_model:
        feat = x.reshape(B, 2, 14 * 14).sum(axis=1)
    else:
        feat = x.reshape(B, 2 * 14 * 14)
    h1 = jnp.maximum(feat @ w1 + b1, 0.0)
    h2 = jnp.maximum(h1 @ w2 + b2, 0.0)
    logits = h2 @ w3 + b3
    return jax.nn.sigmoid(logits), logits


if __name__ == "__main__":
    key = jax.random.PRNGKey(0)
    kx, kp = jax.random.split(key)

    B, hidden_dim = 8, 256
    x = jax.random.normal(kx, (B, 2, 14, 14), jnp.float32)   # NCHW, like cmnist

    # Colored (default) branch.
    params = init_params(kp, grayscale_model=False, hidden_dim=hidden_dim)
    probas, logits = cmnist_mlp_forward(x, params, grayscale_model=False)
    jax.block_until_ready((probas, logits))
    probas_ref, logits_ref = _ref_forward(x, params, False)
    assert probas.shape == (B, 2) and logits.shape == (B, 2)
    assert probas.dtype == jnp.float32 and logits.dtype == jnp.float32
    assert jnp.allclose(logits, logits_ref, atol=1e-4, rtol=1e-4)
    assert jnp.allclose(probas, probas_ref, atol=1e-5, rtol=1e-5)

    # Grayscale branch (fused in-kernel channel sum).
    params_g = init_params(kp, grayscale_model=True, hidden_dim=hidden_dim)
    probas_g, logits_g = cmnist_mlp_forward(x, params_g, grayscale_model=True)
    jax.block_until_ready((probas_g, logits_g))
    probas_g_ref, logits_g_ref = _ref_forward(x, params_g, True)
    assert jnp.allclose(logits_g, logits_g_ref, atol=1e-4, rtol=1e-4)
    assert jnp.allclose(probas_g, probas_g_ref, atol=1e-5, rtol=1e-5)

    # Multi-tile grid + batch-pad path (B=40 -> B_pad=48, grid=(2,)).
    B2 = 40
    x2 = jax.random.normal(jax.random.PRNGKey(1), (B2, 2, 14, 14), jnp.float32)
    probas2, logits2 = cmnist_mlp_forward(x2, params, grayscale_model=False)
    jax.block_until_ready((probas2, logits2))
    probas2_ref, logits2_ref = _ref_forward(x2, params, False)
    assert probas2.shape == (B2, 2) and logits2.shape == (B2, 2)
    assert jnp.allclose(logits2, logits2_ref, atol=1e-4, rtol=1e-4)
    assert jnp.allclose(probas2, probas2_ref, atol=1e-5, rtol=1e-5)

    print("KERNEL_OK")
</pallas_src>

<mosaic_0001>
module attributes {stable_mosaic.version = 11 : i64} {
  func.func @_mlp_kernel(%arg0: i32, %arg1: memref<8x392xf32, #tpu.memory_space<vmem>>, %arg2: memref<392x256xf32, #tpu.memory_space<vmem>>, %arg3: memref<1x256xf32, #tpu.memory_space<vmem>>, %arg4: memref<256x256xf32, #tpu.memory_space<vmem>>, %arg5: memref<1x256xf32, #tpu.memory_space<vmem>>, %arg6: memref<256x2xf32, #tpu.memory_space<vmem>>, %arg7: memref<1x2xf32, #tpu.memory_space<vmem>>, %arg8: memref<8x2xf32, #tpu.memory_space<vmem>>, %arg9: memref<8x2xf32, #tpu.memory_space<vmem>>) attributes {dimension_semantics = [#tpu.dimension_semantics<parallel>], iteration_bounds = array<i64: 1>, scalar_prefetch = 0 : i64, scratch_operands = 0 : i64, tpu.core_type = #tpu.core_type<tc>, window_params = [{transform_indices = @transform_0, window_bounds = array<i64: 8, 392>}, {pipeline_mode = #tpu.pipeline_mode<synchronous>, transform_indices = @transform_1, window_bounds = array<i64: 392, 256>}, {pipeline_mode = #tpu.pipeline_mode<synchronous>, transform_indices = @transform_2, window_bounds = array<i64: 1, 256>}, {pipeline_mode = #tpu.pipeline_mode<synchronous>, transform_indices = @transform_3, window_bounds = array<i64: 256, 256>}, {pipeline_mode = #tpu.pipeline_mode<synchronous>, transform_indices = @transform_4, window_bounds = array<i64: 1, 256>}, {pipeline_mode = #tpu.pipeline_mode<synchronous>, transform_indices = @transform_5, window_bounds = array<i64: 256, 2>}, {pipeline_mode = #tpu.pipeline_mode<synchronous>, transform_indices = @transform_6, window_bounds = array<i64: 1, 2>}, {transform_indices = @transform_7, window_bounds = array<i64: 8, 2>}, {transform_indices = @transform_8, window_bounds = array<i64: 8, 2>}]} {
    %c0 = arith.constant 0 : index
    %c0_0 = arith.constant 0 : index
    %0 = vector.load %arg1[%c0, %c0_0] : memref<8x392xf32, #tpu.memory_space<vmem>>, vector<8x392xf32>
    %c0_1 = arith.constant 0 : index
    %c0_2 = arith.constant 0 : index
    %1 = vector.load %arg2[%c0_1, %c0_2] : memref<392x256xf32, #tpu.memory_space<vmem>>, vector<392x256xf32>
    %cst = arith.constant dense<0.000000e+00> : vector<8x256xf32>
    %2 = tpu.matmul %0, %1, %cst {dimension_numbers = #tpu.dot_dimension_numbers<[1], [0], [0], [1], [0, 0, 1, 1], [], []>} : vector<8x392xf32>, vector<392x256xf32>, vector<8x256xf32> -> vector<8x256xf32>
    %c0_3 = arith.constant 0 : index
    %c0_4 = arith.constant 0 : index
    %3 = vector.load %arg3[%c0_3, %c0_4] : memref<1x256xf32, #tpu.memory_space<vmem>>, vector<1x256xf32>
    %4 = vector.broadcast %3 : vector<1x256xf32> to vector<8x256xf32>
    %5 = arith.addf %2, %4 : vector<8x256xf32>
    %cst_5 = arith.constant 0.000000e+00 : f32
    %6 = vector.broadcast %cst_5 : f32 to vector<8x256xf32>
    %7 = arith.maximumf %5, %6 : vector<8x256xf32>
    %c0_6 = arith.constant 0 : index
    %c0_7 = arith.constant 0 : index
    %8 = vector.load %arg4[%c0_6, %c0_7] : memref<256x256xf32, #tpu.memory_space<vmem>>, vector<256x256xf32>
    %cst_8 = arith.constant dense<0.000000e+00> : vector<8x256xf32>
    %9 = tpu.matmul %7, %8, %cst_8 {dimension_numbers = #tpu.dot_dimension_numbers<[1], [0], [0], [1], [0, 0, 1, 1], [], []>} : vector<8x256xf32>, vector<256x256xf32>, vector<8x256xf32> -> vector<8x256xf32>
    %c0_9 = arith.constant 0 : index
    %c0_10 = arith.constant 0 : index
    %10 = vector.load %arg5[%c0_9, %c0_10] : memref<1x256xf32, #tpu.memory_space<vmem>>, vector<1x256xf32>
    %11 = vector.broadcast %10 : vector<1x256xf32> to vector<8x256xf32>
    %12 = arith.addf %9, %11 : vector<8x256xf32>
    %cst_11 = arith.constant 0.000000e+00 : f32
    %13 = vector.broadcast %cst_11 : f32 to vector<8x256xf32>
    %14 = arith.maximumf %12, %13 : vector<8x256xf32>
    %c0_12 = arith.constant 0 : index
    %c0_13 = arith.constant 0 : index
    %15 = vector.load %arg6[%c0_12, %c0_13] : memref<256x2xf32, #tpu.memory_space<vmem>>, vector<256x2xf32>
    %cst_14 = arith.constant dense<0.000000e+00> : vector<8x2xf32>
    %16 = tpu.matmul %14, %15, %cst_14 {dimension_numbers = #tpu.dot_dimension_numbers<[1], [0], [0], [1], [0, 0, 1, 1], [], []>} : vector<8x256xf32>, vector<256x2xf32>, vector<8x2xf32> -> vector<8x2xf32>
    %c0_15 = arith.constant 0 : index
    %c0_16 = arith.constant 0 : index
    %17 = vector.load %arg7[%c0_15, %c0_16] : memref<1x2xf32, #tpu.memory_space<vmem>>, vector<1x2xf32>
    %18 = vector.broadcast %17 : vector<1x2xf32> to vector<8x2xf32>
    %19 = arith.addf %16, %18 : vector<8x2xf32>
    %c0_17 = arith.constant 0 : index
    %c0_18 = arith.constant 0 : index
    %20 = vector.load %arg9[%c0_17, %c0_18] : memref<8x2xf32, #tpu.memory_space<vmem>>, vector<8x2xf32>
    tpu.vector_store %arg9[%c0_17, %c0_18], %19 {strides = array<i32>} : memref<8x2xf32, #tpu.memory_space<vmem>>, vector<8x2xf32>,
    %21 = arith.negf %19 : vector<8x2xf32>
    %22 = math.exp %21 : vector<8x2xf32>
    %cst_19 = arith.constant 1.000000e+00 : f32
    %23 = vector.broadcast %cst_19 : f32 to vector<8x2xf32>
    %24 = arith.addf %23, %22 : vector<8x2xf32>
    %25 = arith.divf %23, %24 : vector<8x2xf32>
    %c0_20 = arith.constant 0 : index
    %c0_21 = arith.constant 0 : index
    %26 = vector.load %arg8[%c0_20, %c0_21] : memref<8x2xf32, #tpu.memory_space<vmem>>, vector<8x2xf32>
    tpu.vector_store %arg8[%c0_20, %c0_21], %25 {strides = array<i32>} : memref<8x2xf32, #tpu.memory_space<vmem>>, vector<8x2xf32>,
    return
  }
  func.func @transform_0(%arg0: i32) -> (i32, i32) {
    %c0_i32 = arith.constant 0 : i32
    %c0_i32_0 = arith.constant 0 : i32
    return %arg0, %c0_i32 : i32, i32
  }
  func.func @transform_1(%arg0: i32) -> (i32, i32) {
    %c0_i32 = arith.constant 0 : i32
    %c0_i32_0 = arith.constant 0 : i32
    %c0_i32_1 = arith.constant 0 : i32
    return %c0_i32, %c0_i32_0 : i32, i32
  }
  func.func @transform_2(%arg0: i32) -> (i32, i32) {
    %c0_i32 = arith.constant 0 : i32
    %c0_i32_0 = arith.constant 0 : i32
    %c0_i32_1 = arith.constant 0 : i32
    return %c0_i32, %c0_i32_0 : i32, i32
  }
  func.func @transform_3(%arg0: i32) -> (i32, i32) {
    %c0_i32 = arith.constant 0 : i32
    %c0_i32_0 = arith.constant 0 : i32
    %c0_i32_1 = arith.constant 0 : i32
    return %c0_i32, %c0_i32_0 : i32, i32
  }
  func.func @transform_4(%arg0: i32) -> (i32, i32) {
    %c0_i32 = arith.constant 0 : i32
    %c0_i32_0 = arith.constant 0 : i32
    %c0_i32_1 = arith.constant 0 : i32
    return %c0_i32, %c0_i32_0 : i32, i32
  }
  func.func @transform_5(%arg0: i32) -> (i32, i32) {
    %c0_i32 = arith.constant 0 : i32
    %c0_i32_0 = arith.constant 0 : i32
    %c0_i32_1 = arith.constant 0 : i32
    return %c0_i32, %c0_i32_0 : i32, i32
  }
  func.func @transform_6(%arg0: i32) -> (i32, i32) {
    %c0_i32 = arith.constant 0 : i32
    %c0_i32_0 = arith.constant 0 : i32
    %c0_i32_1 = arith.constant 0 : i32
    return %c0_i32, %c0_i32_0 : i32, i32
  }
  func.func @transform_7(%arg0: i32) -> (i32, i32) {
    %c0_i32 = arith.constant 0 : i32
    %c0_i32_0 = arith.constant 0 : i32
    return %arg0, %c0_i32 : i32, i32
  }
  func.func @transform_8(%arg0: i32) -> (i32, i32) {
    %c0_i32 = arith.constant 0 : i32
    %c0_i32_0 = arith.constant 0 : i32
    return %arg0, %c0_i32 : i32, i32
  }
}

</mosaic_0001>

<llo_original>
// kernel: cmnist_mlp_forward.1
$region0: #{cmnist_mlp_forward.1}
  #allocation0 [shape = 'u32[]', space=smem, size = 0x4, offset = 0x4, fixed_abs, tag = 'smem constant byte address 0x4 - core index']
  #allocation1 [shape = 'u32[144,128]{1,0:T(1,128)}', space=vmem, size = 0x12000, scoped, tag = 'internal scratch']
  %s0 = inlined_call_operand.vmem [shape: f32[8,392], index: 0, kind: input, shape index: {}]
  %s1 = inlined_call_operand.vmem [shape: f32[392,256], index: 1, kind: input, shape index: {}]
  %s2 = inlined_call_operand.vmem [shape: f32[1,256], index: 2, kind: input, shape index: {}]
  %s3 = inlined_call_operand.hbm [shape: f32[256,256], index: 3, kind: input, shape index: {}]
  %s4 = inlined_call_operand.vmem [shape: f32[1,256], index: 4, kind: input, shape index: {}]
  %s5 = inlined_call_operand.vmem [shape: f32[256,2], index: 5, kind: input, shape index: {}]
  %s6 = inlined_call_operand.vmem [shape: f32[1,2], index: 6, kind: input, shape index: {}]
  %s7 = inlined_call_operand.vmem [shape: f32[8,2], index: 7, kind: output, shape index: {0}]
  %s8 = inlined_call_operand.vmem [shape: f32[8,2], index: 8, kind: output, shape index: {1}]
  %9 = xla_tuple %s7, %s8
  %s10 = sld [smem:[#allocation0]]
  $region50: #{cmnist_mlp_forward.1} parent=0
    _
  %s12 = ssub.s32 1, %s10
  %s13 = scalar_select 0, %s12, %s10
  $region1: #{cmnist_mlp_forward.1} parent=0
    #allocation2 [shape = 'u8[262144]{0}', space=vmem, size = 0x40000, scoped, tag = 'input window, operand 3, single buffered']
    #allocation3 [shape = 's32[1]{0}', space=sflag, size = 0x4, scoped, tag = 'scoped memory for cmnist_mlp_forward.1']
    %14 = vsyncpa [#allocation3], 0
    // Predicated region
    $region2: #{cmnist_mlp_forward.1} parent=1 // pred_check
      _
    $region3: #{cmnist_mlp_forward.1} parent=1 // pred_check_branch
      %16 = sbr.rel (0) target = $region5
    $region4: #{cmnist_mlp_forward.1} parent=1 // pred_region
      _
    $region5: #{cmnist_mlp_forward.1} parent=1 // pred_fallthru
      _
    // Predicated region
    $region6: #{cmnist_mlp_forward.1} parent=1 // pred_check
      _
    $region7: #{cmnist_mlp_forward.1} parent=1 // pred_check_branch
      %18 = sbr.rel (0) target = $region9
    $region8: #{cmnist_mlp_forward.1} parent=1 // pred_region
      _
    $region9: #{cmnist_mlp_forward.1} parent=1 // pred_fallthru
      _
    // Predicated region
    $region10: #{cmnist_mlp_forward.1} parent=1 // pred_check
      _
    $region11: #{cmnist_mlp_forward.1} parent=1 // pred_check_branch
      %20 = sbr.rel (0) target = $region13
    $region12: #{cmnist_mlp_forward.1} parent=1 // pred_region
      _
    $region13: #{cmnist_mlp_forward.1} parent=1 // pred_fallthru
      _
    // Predicated region
    $region14: #{cmnist_mlp_forward.1} parent=1 // pred_check
      _
    $region15: #{cmnist_mlp_forward.1} parent=1 // pred_check_branch
      %22 = sbr.rel (0) target = $region17
    $region16: #{cmnist_mlp_forward.1} parent=1 // pred_region
      %s24 = ssub.s32 8192, 8192
      %25 = vsyncadd [#allocation3], %s24
      %s26 = sshll.u32 [#allocation2], 4
      %s27 = int_to_ptr.vmem [resolvable:$true] %s26
      %32 = dma.hbm_to_vmem [thread:$0]  %s3, 8192, %s27, [#allocation3], 256, 256, 16
    $region17: #{cmnist_mlp_forward.1} parent=1 // pred_fallthru
      _
    // Predicated region
    $region18: #{cmnist_mlp_forward.1} parent=1 // pred_check
      _
    $region19: #{cmnist_mlp_forward.1} parent=1 // pred_check_branch
      %34 = sbr.rel (0) target = $region21
    $region20: #{cmnist_mlp_forward.1} parent=1 // pred_region
      _
    $region21: #{cmnist_mlp_forward.1} parent=1 // pred_fallthru
      _
    // Predicated region
    $region22: #{cmnist_mlp_forward.1} parent=1 // pred_check
      _
    $region23: #{cmnist_mlp_forward.1} parent=1 // pred_check_branch
      %36 = sbr.rel (0) target = $region25
    $region24: #{cmnist_mlp_forward.1} parent=1 // pred_region
      _
    $region25: #{cmnist_mlp_forward.1} parent=1 // pred_fallthru
      _
    // Predicated region
    $region26: #{cmnist_mlp_forward.1} parent=1 // pred_check
      _
    $region27: #{cmnist_mlp_forward.1} parent=1 // pred_check_branch
      %38 = sbr.rel (0) target = $region29
    $region28: #{cmnist_mlp_forward.1} parent=1 // pred_region
      _
    $region29: #{cmnist_mlp_forward.1} parent=1 // pred_fallthru
      _
    // Predicated region
    $region30: #{cmnist_mlp_forward.1} parent=1 // pred_check
      _
    $region31: #{cmnist_mlp_forward.1} parent=1 // pred_check_branch
      %40 = sbr.rel (0) target = $region33
    $region32: #{cmnist_mlp_forward.1} parent=1 // pred_region
      %41 = dma.done [#allocation3], 8192
    $region33: #{cmnist_mlp_forward.1} parent=1 // pred_fallthru
      _
    %v42 = vld [vmem:[%s0] sm:$0xff]
    %v43 = vld [vmem:[%s0 + $0x8] sm:$0xff]
    %v44 = vld [vmem:[%s0 + $0x10] sm:$0xff]
    %v45 = vld [vmem:[%s0 + $0x18] sm:$0xff]
    %v46 = vld [vmem:[%s1] sm:$0xff]
    %v47 = vld [vmem:[%s1 + $0x8] sm:$0xff]
    %v48 = vld [vmem:[%s1 + $0x10] sm:$0xff]
    %v49 = vld [vmem:[%s1 + $0x18] sm:$0xff]
    %v50 = vld [vmem:[%s1 + $0x20] sm:$0xff]
    %v51 = vld [vmem:[%s1 + $0x28] sm:$0xff]
    %v52 = vld [vmem:[%s1 + $0x30] sm:$0xff]
    %v53 = vld [vmem:[%s1 + $0x38] sm:$0xff]
    %v54 = vld [vmem:[%s1 + $0x40] sm:$0xff]
    %v55 = vld [vmem:[%s1 + $0x48] sm:$0xff]
    %v56 = vld [vmem:[%s1 + $0x50] sm:$0xff]
    %v57 = vld [vmem:[%s1 + $0x58] sm:$0xff]
    %v58 = vld [vmem:[%s1 + $0x60] sm:$0xff]
    %v59 = vld [vmem:[%s1 + $0x68] sm:$0xff]
    %v60 = vld [vmem:[%s1 + $0x70] sm:$0xff]
    %v61 = vld [vmem:[%s1 + $0x78] sm:$0xff]
    %v62 = vld [vmem:[%s1 + $0x80] sm:$0xff]
    %v63 = vld [vmem:[%s1 + $0x88] sm:$0xff]
    %v64 = vld [vmem:[%s1 + $0x90] sm:$0xff]
    %v65 = vld [vmem:[%s1 + $0x98] sm:$0xff]
    %v66 = vld [vmem:[%s1 + $0xa0] sm:$0xff]
    %v67 = vld [vmem:[%s1 + $0xa8] sm:$0xff]
    %v68 = vld [vmem:[%s1 + $0xb0] sm:$0xff]
    %v69 = vld [vmem:[%s1 + $0xb8] sm:$0xff]
    %v70 = vld [vmem:[%s1 + $0xc0] sm:$0xff]
    %v71 = vld [vmem:[%s1 + $0xc8] sm:$0xff]
    %v72 = vld [vmem:[%s1 + $0xd0] sm:$0xff]
    %v73 = vld [vmem:[%s1 + $0xd8] sm:$0xff]
    %v74 = vld [vmem:[%s1 + $0xe0] sm:$0xff]
    %v75 = vld [vmem:[%s1 + $0xe8] sm:$0xff]
    %v76 = vld [vmem:[%s1 + $0xf0] sm:$0xff]
    %v77 = vld [vmem:[%s1 + $0xf8] sm:$0xff]
    %v78 = vld [vmem:[%s1 + $0x100] sm:$0xff]
    %v79 = vld [vmem:[%s1 + $0x108] sm:$0xff]
    %v80 = vld [vmem:[%s1 + $0x110] sm:$0xff]
    %v81 = vld [vmem:[%s1 + $0x118] sm:$0xff]
    %v82 = vld [vmem:[%s1 + $0x120] sm:$0xff]
    %v83 = vld [vmem:[%s1 + $0x128] sm:$0xff]
    %v84 = vld [vmem:[%s1 + $0x130] sm:$0xff]
    %v85 = vld [vmem:[%s1 + $0x138] sm:$0xff]
    %v86 = vld [vmem:[%s1 + $0x140] sm:$0xff]
    %v87 = vld [vmem:[%s1 + $0x148] sm:$0xff]
    %v88 = vld [vmem:[%s1 + $0x150] sm:$0xff]
    %v89 = vld [vmem:[%s1 + $0x158] sm:$0xff]
    %v90 = vld [vmem:[%s1 + $0x160] sm:$0xff]
    %v91 = vld [vmem:[%s1 + $0x168] sm:$0xff]
    %v92 = vld [vmem:[%s1 + $0x170] sm:$0xff]
    %v93 = vld [vmem:[%s1 + $0x178] sm:$0xff]
    %v94 = vld [vmem:[%s1 + $0x180] sm:$0xff]
    %v95 = vld [vmem:[%s1 + $0x188] sm:$0xff]
    %v96 = vld [vmem:[%s1 + $0x190] sm:$0xff]
    %v97 = vld [vmem:[%s1 + $0x198] sm:$0xff]
    %v98 = vld [vmem:[%s1 + $0x1a0] sm:$0xff]
    %v99 = vld [vmem:[%s1 + $0x1a8] sm:$0xff]
    %v100 = vld [vmem:[%s1 + $0x1b0] sm:$0xff]
    %v101 = vld [vmem:[%s1 + $0x1b8] sm:$0xff]
    %v102 = vld [vmem:[%s1 + $0x1c0] sm:$0xff]
    %v103 = vld [vmem:[%s1 + $0x1c8] sm:$0xff]
    %v104 = vld [vmem:[%s1 + $0x1d0] sm:$0xff]
    %v105 = vld [vmem:[%s1 + $0x1d8] sm:$0xff]
    %v106 = vld [vmem:[%s1 + $0x1e0] sm:$0xff]
    %v107 = vld [vmem:[%s1 + $0x1e8] sm:$0xff]
    %v108 = vld [vmem:[%s1 + $0x1f0] sm:$0xff]
    %v109 = vld [vmem:[%s1 + $0x1f8] sm:$0xff]
    %v110 = vld [vmem:[%s1 + $0x200] sm:$0xff]
    %v111 = vld [vmem:[%s1 + $0x208] sm:$0xff]
    %v112 = vld [vmem:[%s1 + $0x210] sm:$0xff]
    %v113 = vld [vmem:[%s1 + $0x218] sm:$0xff]
    %v114 = vld [vmem:[%s1 + $0x220] sm:$0xff]
    %v115 = vld [vmem:[%s1 + $0x228] sm:$0xff]
    %v116 = vld [vmem:[%s1 + $0x230] sm:$0xff]
    %v117 = vld [vmem:[%s1 + $0x238] sm:$0xff]
    %v118 = vld [vmem:[%s1 + $0x240] sm:$0xff]
    %v119 = vld [vmem:[%s1 + $0x248] sm:$0xff]
    %v120 = vld [vmem:[%s1 + $0x250] sm:$0xff]
    %v121 = vld [vmem:[%s1 + $0x258] sm:$0xff]
    %v122 = vld [vmem:[%s1 + $0x260] sm:$0xff]
    %v123 = vld [vmem:[%s1 + $0x268] sm:$0xff]
    %v124 = vld [vmem:[%s1 + $0x270] sm:$0xff]
    %v125 = vld [vmem:[%s1 + $0x278] sm:$0xff]
    %v126 = vld [vmem:[%s1 + $0x280] sm:$0xff]
    %v127 = vld [vmem:[%s1 + $0x288] sm:$0xff]
    %v128 = vld [vmem:[%s1 + $0x290] sm:$0xff]
    %v129 = vld [vmem:[%s1 + $0x298] sm:$0xff]
    %v130 = vld [vmem:[%s1 + $0x2a0] sm:$0xff]
    %v131 = vld [vmem:[%s1 + $0x2a8] sm:$0xff]
    %v132 = vld [vmem:[%s1 + $0x2b0] sm:$0xff]
    %v133 = vld [vmem:[%s1 + $0x2b8] sm:$0xff]
    %v134 = vld [vmem:[%s1 + $0x2c0] sm:$0xff]
    %v135 = vld [vmem:[%s1 + $0x2c8] sm:$0xff]
    %v136 = vld [vmem:[%s1 + $0x2d0] sm:$0xff]
    %v137 = vld [vmem:[%s1 + $0x2d8] sm:$0xff]
    %v138 = vld [vmem:[%s1 + $0x2e0] sm:$0xff]
    %v139 = vld [vmem:[%s1 + $0x2e8] sm:$0xff]
    %v140 = vld [vmem:[%s1 + $0x2f0] sm:$0xff]
    %v141 = vld [vmem:[%s1 + $0x2f8] sm:$0xff]
    %v142 = vld [vmem:[%s1 + $0x300] sm:$0xff]
    %v143 = vld [vmem:[%s1 + $0x308] sm:$0xff]
    %v144 = vld [vmem:[%s2] sm:$0x3]
    %v146 = vlaneseq
    %v147 = vshrl.u32 %v146, 7
    %v148 = vsub.s32 0, %v147
    %v149 = vrot.slane %v144, %v148
    %v150 = vlaneseq
    %v151 = vshrl.u32 %v150, 7
    %v152 = vsub.s32 1, %v151
    %v153 = vrot.slane %v144, %v152
    %vm156 = vcmask 64512
    %v158 = vsel %vm156, %v45, 0
    %160 = vmatprep.subr.mxu0 %v47
    %161 = vmatpush1.msra.mxu0 %v46
    %162 = vmatprep.subr.mxu0 %v49
    %163 = vmatpush1.msra.mxu0 %v48
    %164 = vmatprep.subr.mxu0 %v51
    %165 = vmatpush1.msra.mxu0 %v50
    %166 = vmatprep.subr.mxu0 %v53
    %167 = vmatpush1.msra.mxu0 %v52
    %168 = vmatprep.subr.mxu0 %v55
    %169 = vmatpush1.msra.mxu0 %v54
    %170 = vmatprep.subr.mxu0 %v57
    %171 = vmatpush1.msra.mxu0 %v56
    %172 = vmatprep.subr.mxu0 %v59
    %173 = vmatpush1.msra.mxu0 %v58
    %174 = vmatprep.subr.mxu0 %v61
    %175 = vmatpush1.msra.mxu0 %v60
    %176 = vmatprep.subr.mxu0 %v63
    %177 = vmatpush1.msra.mxu0 %v62
    %178 = vmatprep.subr.mxu0 %v65
    %179 = vmatpush1.msra.mxu0 %v64
    %180 = vmatprep.subr.mxu0 %v67
    %181 = vmatpush1.msra.mxu0 %v66
    %182 = vmatprep.subr.mxu0 %v69
    %183 = vmatpush1.msra.mxu0 %v68
    %184 = vmatprep.subr.mxu0 %v71
    %185 = vmatpush1.msra.mxu0 %v70
    %186 = vmatprep.subr.mxu0 %v73
    %187 = vmatpush1.msra.mxu0 %v72
    %188 = vmatprep.subr.mxu0 %v75
    %189 = vmatpush1.msra.mxu0 %v74
    %190 = vmatprep.subr.mxu0 %v77
    %191 = vmatpush1.msra.mxu0 %v76
    %192 = vmatprep.subr.mxu0 %v79
    %193 = vmatpush1.msra.mxu0 %v78
    %194 = vmatprep.subr.mxu0 %v81
    %195 = vmatpush1.msra.mxu0 %v80
    %196 = vmatprep.subr.mxu0 %v83
    %197 = vmatpush1.msra.mxu0 %v82
    %198 = vmatprep.subr.mxu0 %v85
    %199 = vmatpush1.msra.mxu0 %v84
    %200 = vmatprep.subr.mxu0 %v87
    %201 = vmatpush1.msra.mxu0 %v86
    %202 = vmatprep.subr.mxu0 %v89
    %203 = vmatpush1.msra.mxu0 %v88
    %204 = vmatprep.subr.mxu0 %v91
    %205 = vmatpush1.msra.mxu0 %v90
    %206 = vmatprep.subr.mxu0 %v93
    %207 = vmatpush1.msra.mxu0 %v92
    %208 = vmatprep.subr.mxu0 %v95
    %209 = vmatpush1.msra.mxu0 %v94
    %210 = vmatprep.subr.mxu0 %v97
    %211 = vmatpush1.msra.mxu0 %v96
    %212 = vmatprep.subr.mxu0 %v99
    %213 = vmatpush1.msra.mxu0 %v98
    %214 = vmatprep.subr.mxu0 %v101
    %215 = vmatpush1.msra.mxu0 %v100
    %216 = vmatprep.subr.mxu0 %v103
    %217 = vmatpush1.msra.mxu0 %v102
    %218 = vmatprep.subr.mxu0 %v105
    %219 = vmatpush1.msra.mxu0 %v104
    %220 = vmatprep.subr.mxu0 %v107
    %221 = vmatpush1.msra.mxu0 %v106
    %222 = vmatprep.subr.mxu0 %v109
    %223 = vmatpush1.msra.mxu0 %v108
    %224 = vmatprep.mubr.f32.mxu0 %v43
    %225 = vmatmul.mubr.f32.gmra.mrb[0].mxu0 %v42
    %v226 = vpop.f32.mrb[0].mxu0
    %v227 = vadd.f32 %v149, %v226
    %v228 = vpop.f32.mrb[0].mxu0
    %v229 = vadd.f32 %v153, %v228
    %230 = vdwg.mxu0
    %231 = vmatprep.subr.mxu0 %v111
    %232 = vmatpush1.msra.mxu0 %v110
    %233 = vmatprep.subr.mxu0 %v113
    %234 = vmatpush1.msra.mxu0 %v112
    %235 = vmatprep.subr.mxu0 %v115
    %236 = vmatpush1.msra.mxu0 %v114
    %237 = vmatprep.subr.mxu0 %v117
    %238 = vmatpush1.msra.mxu0 %v116
    %239 = vmatprep.subr.mxu0 %v119
    %240 = vmatpush1.msra.mxu0 %v118
    %241 = vmatprep.subr.mxu0 %v121
    %242 = vmatpush1.msra.mxu0 %v120
    %243 = vmatprep.subr.mxu0 %v123
    %244 = vmatpush1.msra.mxu0 %v122
    %245 = vmatprep.subr.mxu0 %v125
    %246 = vmatpush1.msra.mxu0 %v124
    %247 = vmatprep.subr.mxu0 %v127
    %248 = vmatpush1.msra.mxu0 %v126
    %249 = vmatprep.subr.mxu0 %v129
    %250 = vmatpush1.msra.mxu0 %v128
    %251 = vmatprep.subr.mxu0 %v131
    %252 = vmatpush1.msra.mxu0 %v130
    %253 = vmatprep.subr.mxu0 %v133
    %254 = vmatpush1.msra.mxu0 %v132
    %255 = vmatprep.subr.mxu0 %v135
    %256 = vmatpush1.msra.mxu0 %v134
    %257 = vmatprep.subr.mxu0 %v137
    %258 = vmatpush1.msra.mxu0 %v136
    %259 = vmatprep.subr.mxu0 %v139
    %260 = vmatpush1.msra.mxu0 %v138
    %261 = vmatprep.subr.mxu0 %v141
    %262 = vmatpush1.msra.mxu0 %v140
    %263 = vmatprep.subr.mxu0 %v143
    %264 = vmatpush1.msra.mxu0 %v142
    %265 = vmatprep.subr.mxu0 0.0
    %266 = vmatpush1.msra.mxu0 0.0
    %267 = vmatprep.subr.mxu0 0.0
    %268 = vmatpush1.msra.mxu0 0.0
    %269 = vmatprep.subr.mxu0 0.0
    %270 = vmatpush1.msra.mxu0 0.0
    %271 = vmatprep.subr.mxu0 0.0
    %272 = vmatpush1.msra.mxu0 0.0
    %273 = vmatprep.subr.mxu0 0.0
    %274 = vmatpush1.msra.mxu0 0.0
    %275 = vmatprep.subr.mxu0 0.0
    %276 = vmatpush1.msra.mxu0 0.0
    %277 = vmatprep.subr.mxu0 0.0
    %278 = vmatpush1.msra.mxu0 0.0
    %279 = vmatprep.subr.mxu0 0.0
    %280 = vmatpush1.msra.mxu0 0.0
    %281 = vmatprep.subr.mxu0 0.0
    %282 = vmatpush1.msra.mxu0 0.0
    %283 = vmatprep.subr.mxu0 0.0
    %284 = vmatpush1.msra.mxu0 0.0
    %285 = vmatprep.subr.mxu0 0.0
    %286 = vmatpush1.msra.mxu0 0.0
    %287 = vmatprep.subr.mxu0 0.0
    %288 = vmatpush1.msra.mxu0 0.0
    %289 = vmatprep.subr.mxu0 0.0
    %290 = vmatpush1.msra.mxu0 0.0
    %291 = vmatprep.subr.mxu0 0.0
    %292 = vmatpush1.msra.mxu0 0.0
    %293 = vmatprep.subr.mxu0 0.0
    %294 = vmatpush1.msra.mxu0 0.0
    %295 = vmatprep.mubr.f32.mxu0 %v158
    %296 = vmatmul.mubr.f32.gmra.mrb[0].mxu0 %v44
    %v297 = vpop.f32.mrb[0].mxu0
    %v298 = vadd.f32 %v227, %v297
    %v299 = vpop.f32.mrb[0].mxu0
    %v300 = vadd.f32 %v229, %v299
    %301 = vdwg.mxu0
    %v302 = vmax.f32 %v298, 0.0
    %v303 = vmax.f32 %v300, 0.0
    %v304 = vld [vmem:[#allocation2] sm:$0xff]
    %v305 = vld [vmem:[#allocation2 + $0x8] sm:$0xff]
    %v306 = vld [vmem:[#allocation2 + $0x10] sm:$0xff]
    %v307 = vld [vmem:[#allocation2 + $0x18] sm:$0xff]
    %v308 = vld [vmem:[#allocation2 + $0x20] sm:$0xff]
    %v309 = vld [vmem:[#allocation2 + $0x28] sm:$0xff]
    %v310 = vld [vmem:[#allocation2 + $0x30] sm:$0xff]
    %v311 = vld [vmem:[#allocation2 + $0x38] sm:$0xff]
    %v312 = vld [vmem:[#allocation2 + $0x40] sm:$0xff]
    %v313 = vld [vmem:[#allocation2 + $0x48] sm:$0xff]
    %v314 = vld [vmem:[#allocation2 + $0x50] sm:$0xff]
    %v315 = vld [vmem:[#allocation2 + $0x58] sm:$0xff]
    %v316 = vld [vmem:[#allocation2 + $0x60] sm:$0xff]
    %v317 = vld [vmem:[#allocation2 + $0x68] sm:$0xff]
    %v318 = vld [vmem:[#allocation2 + $0x70] sm:$0xff]
    %v319 = vld [vmem:[#allocation2 + $0x78] sm:$0xff]
    %v320 = vld [vmem:[#allocation2 + $0x80] sm:$0xff]
    %v321 = vld [vmem:[#allocation2 + $0x88] sm:$0xff]
    %v322 = vld [vmem:[#allocation2 + $0x90] sm:$0xff]
    %v323 = vld [vmem:[#allocation2 + $0x98] sm:$0xff]
    %v324 = vld [vmem:[#allocation2 + $0xa0] sm:$0xff]
    %v325 = vld [vmem:[#allocation2 + $0xa8] sm:$0xff]
    %v326 = vld [vmem:[#allocation2 + $0xb0] sm:$0xff]
    %v327 = vld [vmem:[#allocation2 + $0xb8] sm:$0xff]
    %v328 = vld [vmem:[#allocation2 + $0xc0] sm:$0xff]
    %v329 = vld [vmem:[#allocation2 + $0xc8] sm:$0xff]
    %v330 = vld [vmem:[#allocation2 + $0xd0] sm:$0xff]
    %v331 = vld [vmem:[#allocation2 + $0xd8] sm:$0xff]
    %v332 = vld [vmem:[#allocation2 + $0xe0] sm:$0xff]
    %v333 = vld [vmem:[#allocation2 + $0xe8] sm:$0xff]
    %v334 = vld [vmem:[#allocation2 + $0xf0] sm:$0xff]
    %v335 = vld [vmem:[#allocation2 + $0xf8] sm:$0xff]
    %v336 = vld [vmem:[#allocation2 + $0x100] sm:$0xff]
    %v337 = vld [vmem:[#allocation2 + $0x108] sm:$0xff]
    %v338 = vld [vmem:[#allocation2 + $0x110] sm:$0xff]
    %v339 = vld [vmem:[#allocation2 + $0x118] sm:$0xff]
    %v340 = vld [vmem:[#allocation2 + $0x120] sm:$0xff]
    %v341 = vld [vmem:[#allocation2 + $0x128] sm:$0xff]
    %v342 = vld [vmem:[#allocation2 + $0x130] sm:$0xff]
    %v343 = vld [vmem:[#allocation2 + $0x138] sm:$0xff]
    %v344 = vld [vmem:[#allocation2 + $0x140] sm:$0xff]
    %v345 = vld [vmem:[#allocation2 + $0x148] sm:$0xff]
    %v346 = vld [vmem:[#allocation2 + $0x150] sm:$0xff]
    %v347 = vld [vmem:[#allocation2 + $0x158] sm:$0xff]
    %v348 = vld [vmem:[#allocation2 + $0x160] sm:$0xff]
    %v349 = vld [vmem:[#allocation2 + $0x168] sm:$0xff]
    %v350 = vld [vmem:[#allocation2 + $0x170] sm:$0xff]
    %v351 = vld [vmem:[#allocation2 + $0x178] sm:$0xff]
    %v352 = vld [vmem:[#allocation2 + $0x180] sm:$0xff]
    %v353 = vld [vmem:[#allocation2 + $0x188] sm:$0xff]
    %v354 = vld [vmem:[#allocation2 + $0x190] sm:$0xff]
    %v355 = vld [vmem:[#allocation2 + $0x198] sm:$0xff]
    %v356 = vld [vmem:[#allocation2 + $0x1a0] sm:$0xff]
    %v357 = vld [vmem:[#allocation2 + $0x1a8] sm:$0xff]
    %v358 = vld [vmem:[#allocation2 + $0x1b0] sm:$0xff]
    %v359 = vld [vmem:[#allocation2 + $0x1b8] sm:$0xff]
    %v360 = vld [vmem:[#allocation2 + $0x1c0] sm:$0xff]
    %v361 = vld [vmem:[#allocation2 + $0x1c8] sm:$0xff]
    %v362 = vld [vmem:[#allocation2 + $0x1d0] sm:$0xff]
    %v363 = vld [vmem:[#allocation2 + $0x1d8] sm:$0xff]
    %v364 = vld [vmem:[#allocation2 + $0x1e0] sm:$0xff]
    %v365 = vld [vmem:[#allocation2 + $0x1e8] sm:$0xff]
    %v366 = vld [vmem:[#allocation2 + $0x1f0] sm:$0xff]
    %v367 = vld [vmem:[#allocation2 + $0x1f8] sm:$0xff]
    %v368 = vld [vmem:[%s4] sm:$0x3]
    %v370 = vlaneseq
    %v371 = vshrl.u32 %v370, 7
    %v372 = vsub.s32 0, %v371
    %v373 = vrot.slane %v368, %v372
    %v374 = vlaneseq
    %v375 = vshrl.u32 %v374, 7
    %v376 = vsub.s32 1, %v375
    %v377 = vrot.slane %v368, %v376
    %380 = vmatprep.subr.mxu0 %v305
    %381 = vmatpush1.msra.mxu0 %v304
    %382 = vmatprep.subr.mxu0 %v307
    %383 = vmatpush1.msra.mxu0 %v306
    %384 = vmatprep.subr.mxu0 %v309
    %385 = vmatpush1.msra.mxu0 %v308
    %386 = vmatprep.subr.mxu0 %v311
    %387 = vmatpush1.msra.mxu0 %v310
    %388 = vmatprep.subr.mxu0 %v313
    %389 = vmatpush1.msra.mxu0 %v312
    %390 = vmatprep.subr.mxu0 %v315
    %391 = vmatpush1.msra.mxu0 %v314
    %392 = vmatprep.subr.mxu0 %v317
    %393 = vmatpush1.msra.mxu0 %v316
    %394 = vmatprep.subr.mxu0 %v319
    %395 = vmatpush1.msra.mxu0 %v318
    %396 = vmatprep.subr.mxu0 %v321
    %397 = vmatpush1.msra.mxu0 %v320
    %398 = vmatprep.subr.mxu0 %v323
    %399 = vmatpush1.msra.mxu0 %v322
    %400 = vmatprep.subr.mxu0 %v325
    %401 = vmatpush1.msra.mxu0 %v324
    %402 = vmatprep.subr.mxu0 %v327
    %403 = vmatpush1.msra.mxu0 %v326
    %404 = vmatprep.subr.mxu0 %v329
    %405 = vmatpush1.msra.mxu0 %v328
    %406 = vmatprep.subr.mxu0 %v331
    %407 = vmatpush1.msra.mxu0 %v330
    %408 = vmatprep.subr.mxu0 %v333
    %409 = vmatpush1.msra.mxu0 %v332
    %410 = vmatprep.subr.mxu0 %v335
    %411 = vmatpush1.msra.mxu0 %v334
    %412 = vmatprep.subr.mxu0 %v337
    %413 = vmatpush1.msra.mxu0 %v336
    %414 = vmatprep.subr.mxu0 %v339
    %415 = vmatpush1.msra.mxu0 %v338
    %416 = vmatprep.subr.mxu0 %v341
    %417 = vmatpush1.msra.mxu0 %v340
    %418 = vmatprep.subr.mxu0 %v343
    %419 = vmatpush1.msra.mxu0 %v342
    %420 = vmatprep.subr.mxu0 %v345
    %421 = vmatpush1.msra.mxu0 %v344
    %422 = vmatprep.subr.mxu0 %v347
    %423 = vmatpush1.msra.mxu0 %v346
    %424 = vmatprep.subr.mxu0 %v349
    %425 = vmatpush1.msra.mxu0 %v348
    %426 = vmatprep.subr.mxu0 %v351
    %427 = vmatpush1.msra.mxu0 %v350
    %428 = vmatprep.subr.mxu0 %v353
    %429 = vmatpush1.msra.mxu0 %v352
    %430 = vmatprep.subr.mxu0 %v355
    %431 = vmatpush1.msra.mxu0 %v354
    %432 = vmatprep.subr.mxu0 %v357
    %433 = vmatpush1.msra.mxu0 %v356
    %434 = vmatprep.subr.mxu0 %v359
    %435 = vmatpush1.msra.mxu0 %v358
    %436 = vmatprep.subr.mxu0 %v361
    %437 = vmatpush1.msra.mxu0 %v360
    %438 = vmatprep.subr.mxu0 %v363
    %439 = vmatpush1.msra.mxu0 %v362
    %440 = vmatprep.subr.mxu0 %v365
    %441 = vmatpush1.msra.mxu0 %v364
    %442 = vmatprep.subr.mxu0 %v367
    %443 = vmatpush1.msra.mxu0 %v366
    %444 = vmatprep.mubr.f32.mxu0 %v303
    %445 = vmatmul.mubr.f32.gmra.mrb[0].mxu0 %v302
    %v446 = vpop.f32.mrb[0].mxu0
    %v447 = vadd.f32 %v373, %v446
    %v448 = vpop.f32.mrb[0].mxu0
    %v449 = vadd.f32 %v377, %v448
    %450 = vdwg.mxu0
    %v451 = vmax.f32 %v447, 0.0
    %v452 = vmax.f32 %v449, 0.0
    %v453 = vld [vmem:[%s5] sm:$0xff]
    %v454 = vld [vmem:[%s5 + $0x8] sm:$0xff]
    %v455 = vld [vmem:[%s5 + $0x10] sm:$0xff]
    %v456 = vld [vmem:[%s5 + $0x18] sm:$0xff]
    %v457 = vld [vmem:[%s5 + $0x20] sm:$0xff]
    %v458 = vld [vmem:[%s5 + $0x28] sm:$0xff]
    %v459 = vld [vmem:[%s5 + $0x30] sm:$0xff]
    %v460 = vld [vmem:[%s5 + $0x38] sm:$0xff]
    %v461 = vld [vmem:[%s5 + $0x40] sm:$0xff]
    %v462 = vld [vmem:[%s5 + $0x48] sm:$0xff]
    %v463 = vld [vmem:[%s5 + $0x50] sm:$0xff]
    %v464 = vld [vmem:[%s5 + $0x58] sm:$0xff]
    %v465 = vld [vmem:[%s5 + $0x60] sm:$0xff]
    %v466 = vld [vmem:[%s5 + $0x68] sm:$0xff]
    %v467 = vld [vmem:[%s5 + $0x70] sm:$0xff]
    %v468 = vld [vmem:[%s5 + $0x78] sm:$0xff]
    %v469 = vld [vmem:[%s5 + $0x80] sm:$0xff]
    %v470 = vld [vmem:[%s5 + $0x88] sm:$0xff]
    %v471 = vld [vmem:[%s5 + $0x90] sm:$0xff]
    %v472 = vld [vmem:[%s5 + $0x98] sm:$0xff]
    %v473 = vld [vmem:[%s5 + $0xa0] sm:$0xff]
    %v474 = vld [vmem:[%s5 + $0xa8] sm:$0xff]
    %v475 = vld [vmem:[%s5 + $0xb0] sm:$0xff]
    %v476 = vld [vmem:[%s5 + $0xb8] sm:$0xff]
    %v477 = vld [vmem:[%s5 + $0xc0] sm:$0xff]
    %v478 = vld [vmem:[%s5 + $0xc8] sm:$0xff]
    %v479 = vld [vmem:[%s5 + $0xd0] sm:$0xff]
    %v480 = vld [vmem:[%s5 + $0xd8] sm:$0xff]
    %v481 = vld [vmem:[%s5 + $0xe0] sm:$0xff]
    %v482 = vld [vmem:[%s5 + $0xe8] sm:$0xff]
    %v483 = vld [vmem:[%s5 + $0xf0] sm:$0xff]
    %v484 = vld [vmem:[%s5 + $0xf8] sm:$0xff]
    %v485 = vld [vmem:[%s6] sm:$0x1]
    %v487 = vlaneseq
    %v488 = vshrl.u32 %v487, 7
    %v489 = vsub.s32 0, %v488
    %v490 = vrot.slane %v485, %v489
    %492 = vmatprep.subr.mxu0 0.0
    %493 = vmatpush1.msra.mxu0 %v453
    %494 = vmatprep.subr.mxu0 0.0
    %495 = vmatpush1.msra.mxu0 %v454
    %496 = vmatprep.subr.mxu0 0.0
    %497 = vmatpush1.msra.mxu0 %v455
    %498 = vmatprep.subr.mxu0 0.0
    %499 = vmatpush1.msra.mxu0 %v456
    %500 = vmatprep.subr.mxu0 0.0
    %501 = vmatpush1.msra.mxu0 %v457
    %502 = vmatprep.subr.mxu0 0.0
    %503 = vmatpush1.msra.mxu0 %v458
    %504 = vmatprep.subr.mxu0 0.0
    %505 = vmatpush1.msra.mxu0 %v459
    %506 = vmatprep.subr.mxu0 0.0
    %507 = vmatpush1.msra.mxu0 %v460
    %508 = vmatprep.subr.mxu0 0.0
    %509 = vmatpush1.msra.mxu0 %v461
    %510 = vmatprep.subr.mxu0 0.0
    %511 = vmatpush1.msra.mxu0 %v462
    %512 = vmatprep.subr.mxu0 0.0
    %513 = vmatpush1.msra.mxu0 %v463
    %514 = vmatprep.subr.mxu0 0.0
    %515 = vmatpush1.msra.mxu0 %v464
    %516 = vmatprep.subr.mxu0 0.0
    %517 = vmatpush1.msra.mxu0 %v465
    %518 = vmatprep.subr.mxu0 0.0
    %519 = vmatpush1.msra.mxu0 %v466
    %520 = vmatprep.subr.mxu0 0.0
    %521 = vmatpush1.msra.mxu0 %v467
    %522 = vmatprep.subr.mxu0 0.0
    %523 = vmatpush1.msra.mxu0 %v468
    %524 = vmatprep.subr.mxu0 0.0
    %525 = vmatpush1.msra.mxu0 %v469
    %526 = vmatprep.subr.mxu0 0.0
    %527 = vmatpush1.msra.mxu0 %v470
    %528 = vmatprep.subr.mxu0 0.0
    %529 = vmatpush1.msra.mxu0 %v471
    %530 = vmatprep.subr.mxu0 0.0
    %531 = vmatpush1.msra.mxu0 %v472
    %532 = vmatprep.subr.mxu0 0.0
    %533 = vmatpush1.msra.mxu0 %v473
    %534 = vmatprep.subr.mxu0 0.0
    %535 = vmatpush1.msra.mxu0 %v474
    %536 = vmatprep.subr.mxu0 0.0
    %537 = vmatpush1.msra.mxu0 %v475
    %538 = vmatprep.subr.mxu0 0.0
    %539 = vmatpush1.msra.mxu0 %v476
    %540 = vmatprep.subr.mxu0 0.0
    %541 = vmatpush1.msra.mxu0 %v477
    %542 = vmatprep.subr.mxu0 0.0
    %543 = vmatpush1.msra.mxu0 %v478
    %544 = vmatprep.subr.mxu0 0.0
    %545 = vmatpush1.msra.mxu0 %v479
    %546 = vmatprep.subr.mxu0 0.0
    %547 = vmatpush1.msra.mxu0 %v480
    %548 = vmatprep.subr.mxu0 0.0
    %549 = vmatpush1.msra.mxu0 %v481
    %550 = vmatprep.subr.mxu0 0.0
    %551 = vmatpush1.msra.mxu0 %v482
    %552 = vmatprep.subr.mxu0 0.0
    %553 = vmatpush1.msra.mxu0 %v483
    %554 = vmatprep.subr.mxu0 0.0
    %555 = vmatpush1.msra.mxu0 %v484
    %556 = vmatprep.mubr.f32.mxu0 %v452
    %557 = vmatmul.mubr.f32.gmra.mrb[0].mxu0 %v451
    %v558 = vpop.f32.mrb[0].mxu0
    %v559 = vadd.f32 %v490, %v558
    %v560 = vpop.f32.mrb[0].mxu0
    %561 = vdwg.mxu0
    %vm562 = vcmask 15360
    %563 = vst.msk [vmem:[%s8] sm:$0xff] %vm562, %v559
    %v564 = vxor.u32 %v559, 2147483648
    %v565 = vmul.f32 %v564, 1.442695
    %v566 = vpow.pop %v565
    %v567 = vadd.f32 %v566, 1.0
    %v568 = vrcp.pop %v567
    %v569 = vmul.f32 1.0, %v568
    %570 = vst.msk [vmem:[%s7] sm:$0xff] %vm562, %v569
    // Predicated region
    $region34: #{cmnist_mlp_forward.1} parent=1 // pred_check
      _
    $region35: #{cmnist_mlp_forward.1} parent=1 // pred_check_branch
      %572 = sbr.rel (0) target = $region37
    $region36: #{cmnist_mlp_forward.1} parent=1 // pred_region
      _
    $region37: #{cmnist_mlp_forward.1} parent=1 // pred_fallthru
      _
    // Predicated region
    $region38: #{cmnist_mlp_forward.1} parent=1 // pred_check
      _
    $region39: #{cmnist_mlp_forward.1} parent=1 // pred_check_branch
      %574 = sbr.rel (0) target = $region41
    $region40: #{cmnist_mlp_forward.1} parent=1 // pred_region
      _
    $region41: #{cmnist_mlp_forward.1} parent=1 // pred_fallthru
      _
    // Predicated region
    $region42: #{cmnist_mlp_forward.1} parent=1 // pred_check
      _
    $region43: #{cmnist_mlp_forward.1} parent=1 // pred_check_branch
      %576 = sbr.rel (0) target = $region45
    $region44: #{cmnist_mlp_forward.1} parent=1 // pred_region
      _
    $region45: #{cmnist_mlp_forward.1} parent=1 // pred_fallthru
      _
    // Predicated region
    $region46: #{cmnist_mlp_forward.1} parent=1 // pred_check
      _
    $region47: #{cmnist_mlp_forward.1} parent=1 // pred_check_branch
      %578 = sbr.rel (0) target = $region49
    $region48: #{cmnist_mlp_forward.1} parent=1 // pred_region
      _
    $region49: #{cmnist_mlp_forward.1} parent=1 // pred_fallthru
      _
    %579 = vsyncpa [#allocation3], 1

</llo_original>
